<compile_context>
chip_gen: v5e
topology: v5e:2x2
jax: 0.10.0
libtpu: 0.0.40
codegen_flags: <defaults>
</compile_context>

<pallas_src>
import jax
import jax.numpy as jnp
from jax.experimental import pallas as pl
from jax.experimental.pallas import tpu as pltpu

F_IN = 579
H1 = 256
H2 = 64
N_ACT = 6

TB_CAP = 512  # batch tile cap: ~1.2 MB f32 x-tile, comfortably double-buffered in VMEM


def _maverick_kernel(x_ref, w1_ref, b1_ref, w2_ref, b2_ref, w3_ref, b3_ref, out_ref):
    # Layer 1: bf16 operands on the MXU, f32 accumulation, bias + ReLU in f32 (VPU).
    x = x_ref[...].astype(jnp.bfloat16)
    h1 = jnp.dot(x, w1_ref[...].astype(jnp.bfloat16),
                 preferred_element_type=jnp.float32)
    h1 = jnp.maximum(h1 + b1_ref[...], 0.0)
    # Layer 2.
    h2 = jnp.dot(h1.astype(jnp.bfloat16), w2_ref[...].astype(jnp.bfloat16),
                 preferred_element_type=jnp.float32)
    h2 = jnp.maximum(h2 + b2_ref[...], 0.0)
    # Output layer (no activation).
    o = jnp.dot(h2.astype(jnp.bfloat16), w3_ref[...].astype(jnp.bfloat16),
                preferred_element_type=jnp.float32)
    out_ref[...] = (o + b3_ref[...]).astype(out_ref.dtype)


def maverick_forward(x, params):
    """x: (B, 579) float32 -> (B, 6) float32 Q-values."""
    w1, b1, w2, b2, w3, b3 = params
    B = x.shape[0]

    # Batch tile: the whole batch for small B (block dim == full array dim is always
    # a legal BlockSpec), otherwise TB_CAP rows per grid step with a cdiv grid
    # (Pallas masks the out-of-bounds tail of the last tile).
    tb = B if B <= TB_CAP else TB_CAP
    grid = (pl.cdiv(B, tb),)

    def x_map(i):
        return (i, 0)

    def const_map(i):
        return (0, 0)

    return pl.pallas_call(
        _maverick_kernel,
        out_shape=jax.ShapeDtypeStruct((B, N_ACT), jnp.float32),
        grid=grid,
        in_specs=[
            pl.BlockSpec((tb, F_IN), x_map),      # x tile (pipelined per grid step)
            pl.BlockSpec((F_IN, H1), const_map),  # w1 (VMEM-resident, DMA'd once)
            pl.BlockSpec((1, H1), const_map),     # b1
            pl.BlockSpec((H1, H2), const_map),    # w2
            pl.BlockSpec((1, H2), const_map),     # b2
            pl.BlockSpec((H2, N_ACT), const_map), # w3
            pl.BlockSpec((1, N_ACT), const_map),  # b3
        ],
        out_specs=pl.BlockSpec((tb, N_ACT), x_map),
        compiler_params=pltpu.CompilerParams(
            dimension_semantics=("parallel",),
        ),
    )(x, w1, b1, w2, b2, w3, b3)


maverick_forward_jit = jax.jit(maverick_forward)


def init_params(key):
    """Deterministic init mimicking PyTorch nn.Linear default:
    U(-1/sqrt(fan_in), 1/sqrt(fan_in)) for both weight and bias."""
    def linear(key, fan_in, fan_out):
        kw, kb = jax.random.split(key)
        bound = 1.0 / jnp.sqrt(jnp.float32(fan_in))
        w = jax.random.uniform(kw, (fan_in, fan_out), jnp.float32, -bound, bound)
        b = jax.random.uniform(kb, (1, fan_out), jnp.float32, -bound, bound)
        return w, b

    k1, k2, k3 = jax.random.split(key, 3)
    w1, b1 = linear(k1, F_IN, H1)
    w2, b2 = linear(k2, H1, H2)
    w3, b3 = linear(k3, H2, N_ACT)
    return (w1, b1, w2, b2, w3, b3)


def maverick_reference(x, params):
    """Pure-JAX f32 reference for correctness check."""
    w1, b1, w2, b2, w3, b3 = params
    h1 = jnp.maximum(x @ w1 + b1, 0.0)
    h2 = jnp.maximum(h1 @ w2 + b2, 0.0)
    return h2 @ w3 + b3


if __name__ == "__main__":
    key = jax.random.PRNGKey(0)
    kx, kp = jax.random.split(key)

    batch = 2  # tiny-batch latency path: single grid step, block == full array
    x = jax.random.normal(kx, (batch, F_IN), jnp.float32)
    params = init_params(kp)

    out = maverick_forward_jit(x, params)
    out = jax.block_until_ready(out)

    ref = maverick_reference(x, params)
    assert out.shape == (batch, N_ACT)
    # bf16 operands with f32 accumulation -> loosened tolerance vs the f32 reference.
    assert jnp.allclose(out, ref, atol=3e-2, rtol=3e-2), "mismatch vs reference"

    print("KERNEL_OK")
</pallas_src>

<mosaic_0001>
module attributes {stable_mosaic.version = 11 : i64} {
  func.func @_maverick_kernel(%arg0: i32, %arg1: memref<2x579xf32, #tpu.memory_space<vmem>>, %arg2: memref<579x256xf32, #tpu.memory_space<vmem>>, %arg3: memref<1x256xf32, #tpu.memory_space<vmem>>, %arg4: memref<256x64xf32, #tpu.memory_space<vmem>>, %arg5: memref<1x64xf32, #tpu.memory_space<vmem>>, %arg6: memref<64x6xf32, #tpu.memory_space<vmem>>, %arg7: memref<1x6xf32, #tpu.memory_space<vmem>>, %arg8: memref<2x6xf32, #tpu.memory_space<vmem>>) attributes {dimension_semantics = [#tpu.dimension_semantics<parallel>], iteration_bounds = array<i64: 1>, scalar_prefetch = 0 : i64, scratch_operands = 0 : i64, tpu.core_type = #tpu.core_type<tc>, window_params = [{transform_indices = @transform_0, window_bounds = array<i64: 2, 579>}, {pipeline_mode = #tpu.pipeline_mode<synchronous>, transform_indices = @transform_1, window_bounds = array<i64: 579, 256>}, {pipeline_mode = #tpu.pipeline_mode<synchronous>, transform_indices = @transform_2, window_bounds = array<i64: 1, 256>}, {pipeline_mode = #tpu.pipeline_mode<synchronous>, transform_indices = @transform_3, window_bounds = array<i64: 256, 64>}, {pipeline_mode = #tpu.pipeline_mode<synchronous>, transform_indices = @transform_4, window_bounds = array<i64: 1, 64>}, {pipeline_mode = #tpu.pipeline_mode<synchronous>, transform_indices = @transform_5, window_bounds = array<i64: 64, 6>}, {pipeline_mode = #tpu.pipeline_mode<synchronous>, transform_indices = @transform_6, window_bounds = array<i64: 1, 6>}, {transform_indices = @transform_7, window_bounds = array<i64: 2, 6>}]} {
    %c0 = arith.constant 0 : index
    %c0_0 = arith.constant 0 : index
    %0 = vector.load %arg1[%c0, %c0_0] : memref<2x579xf32, #tpu.memory_space<vmem>>, vector<2x579xf32>
    %1 = arith.truncf %0 : vector<2x579xf32> to vector<2x579xbf16>
    %c0_1 = arith.constant 0 : index
    %c0_2 = arith.constant 0 : index
    %2 = vector.load %arg2[%c0_1, %c0_2] : memref<579x256xf32, #tpu.memory_space<vmem>>, vector<579x256xf32>
    %3 = arith.truncf %2 : vector<579x256xf32> to vector<579x256xbf16>
    %cst = arith.constant dense<0.000000e+00> : vector<2x256xf32>
    %4 = tpu.matmul %1, %3, %cst {dimension_numbers = #tpu.dot_dimension_numbers<[1], [0], [0], [1], [0, 0, 1, 1], [], []>} : vector<2x579xbf16>, vector<579x256xbf16>, vector<2x256xf32> -> vector<2x256xf32>
    %c0_3 = arith.constant 0 : index
    %c0_4 = arith.constant 0 : index
    %5 = vector.load %arg3[%c0_3, %c0_4] : memref<1x256xf32, #tpu.memory_space<vmem>>, vector<1x256xf32>
    %6 = vector.broadcast %5 : vector<1x256xf32> to vector<2x256xf32>
    %7 = arith.addf %4, %6 : vector<2x256xf32>
    %cst_5 = arith.constant 0.000000e+00 : f32
    %8 = vector.broadcast %cst_5 : f32 to vector<2x256xf32>
    %9 = arith.maximumf %7, %8 : vector<2x256xf32>
    %10 = arith.truncf %9 : vector<2x256xf32> to vector<2x256xbf16>
    %c0_6 = arith.constant 0 : index
    %c0_7 = arith.constant 0 : index
    %11 = vector.load %arg4[%c0_6, %c0_7] : memref<256x64xf32, #tpu.memory_space<vmem>>, vector<256x64xf32>
    %12 = arith.truncf %11 : vector<256x64xf32> to vector<256x64xbf16>
    %cst_8 = arith.constant dense<0.000000e+00> : vector<2x64xf32>
    %13 = tpu.matmul %10, %12, %cst_8 {dimension_numbers = #tpu.dot_dimension_numbers<[1], [0], [0], [1], [0, 0, 1, 1], [], []>} : vector<2x256xbf16>, vector<256x64xbf16>, vector<2x64xf32> -> vector<2x64xf32>
    %c0_9 = arith.constant 0 : index
    %c0_10 = arith.constant 0 : index
    %14 = vector.load %arg5[%c0_9, %c0_10] : memref<1x64xf32, #tpu.memory_space<vmem>>, vector<1x64xf32>
    %15 = vector.broadcast %14 : vector<1x64xf32> to vector<2x64xf32>
    %16 = arith.addf %13, %15 : vector<2x64xf32>
    %cst_11 = arith.constant 0.000000e+00 : f32
    %17 = vector.broadcast %cst_11 : f32 to vector<2x64xf32>
    %18 = arith.maximumf %16, %17 : vector<2x64xf32>
    %19 = arith.truncf %18 : vector<2x64xf32> to vector<2x64xbf16>
    %c0_12 = arith.constant 0 : index
    %c0_13 = arith.constant 0 : index
    %20 = vector.load %arg6[%c0_12, %c0_13] : memref<64x6xf32, #tpu.memory_space<vmem>>, vector<64x6xf32>
    %21 = arith.truncf %20 : vector<64x6xf32> to vector<64x6xbf16>
    %cst_14 = arith.constant dense<0.000000e+00> : vector<2x6xf32>
    %22 = tpu.matmul %19, %21, %cst_14 {dimension_numbers = #tpu.dot_dimension_numbers<[1], [0], [0], [1], [0, 0, 1, 1], [], []>} : vector<2x64xbf16>, vector<64x6xbf16>, vector<2x6xf32> -> vector<2x6xf32>
    %c0_15 = arith.constant 0 : index
    %c0_16 = arith.constant 0 : index
    %23 = vector.load %arg7[%c0_15, %c0_16] : memref<1x6xf32, #tpu.memory_space<vmem>>, vector<1x6xf32>
    %24 = vector.broadcast %23 : vector<1x6xf32> to vector<2x6xf32>
    %25 = arith.addf %22, %24 : vector<2x6xf32>
    %c0_17 = arith.constant 0 : index
    %c0_18 = arith.constant 0 : index
    %26 = vector.load %arg8[%c0_17, %c0_18] : memref<2x6xf32, #tpu.memory_space<vmem>>, vector<2x6xf32>
    tpu.vector_store %arg8[%c0_17, %c0_18], %25 {strides = array<i32>} : memref<2x6xf32, #tpu.memory_space<vmem>>, vector<2x6xf32>,
    return
  }
  func.func @transform_0(%arg0: i32) -> (i32, i32) {
    %c0_i32 = arith.constant 0 : i32
    %c0_i32_0 = arith.constant 0 : i32
    return %arg0, %c0_i32 : i32, i32
  }
  func.func @transform_1(%arg0: i32) -> (i32, i32) {
    %c0_i32 = arith.constant 0 : i32
    %c0_i32_0 = arith.constant 0 : i32
    %c0_i32_1 = arith.constant 0 : i32
    return %c0_i32, %c0_i32_0 : i32, i32
  }
  func.func @transform_2(%arg0: i32) -> (i32, i32) {
    %c0_i32 = arith.constant 0 : i32
    %c0_i32_0 = arith.constant 0 : i32
    %c0_i32_1 = arith.constant 0 : i32
    return %c0_i32, %c0_i32_0 : i32, i32
  }
  func.func @transform_3(%arg0: i32) -> (i32, i32) {
    %c0_i32 = arith.constant 0 : i32
    %c0_i32_0 = arith.constant 0 : i32
    %c0_i32_1 = arith.constant 0 : i32
    return %c0_i32, %c0_i32_0 : i32, i32
  }
  func.func @transform_4(%arg0: i32) -> (i32, i32) {
    %c0_i32 = arith.constant 0 : i32
    %c0_i32_0 = arith.constant 0 : i32
    %c0_i32_1 = arith.constant 0 : i32
    return %c0_i32, %c0_i32_0 : i32, i32
  }
  func.func @transform_5(%arg0: i32) -> (i32, i32) {
    %c0_i32 = arith.constant 0 : i32
    %c0_i32_0 = arith.constant 0 : i32
    %c0_i32_1 = arith.constant 0 : i32
    return %c0_i32, %c0_i32_0 : i32, i32
  }
  func.func @transform_6(%arg0: i32) -> (i32, i32) {
    %c0_i32 = arith.constant 0 : i32
    %c0_i32_0 = arith.constant 0 : i32
    %c0_i32_1 = arith.constant 0 : i32
    return %c0_i32, %c0_i32_0 : i32, i32
  }
  func.func @transform_7(%arg0: i32) -> (i32, i32) {
    %c0_i32 = arith.constant 0 : i32
    %c0_i32_0 = arith.constant 0 : i32
    return %arg0, %c0_i32 : i32, i32
  }
}

</mosaic_0001>

<llo_original>
// kernel: maverick_forward.1
$region0: #{maverick_forward.1}
  #allocation0 [shape = 'u32[]', space=smem, size = 0x4, offset = 0x4, fixed_abs, tag = 'smem constant byte address 0x4 - core index']
  #allocation1 [shape = 'u32[72,128]{1,0:T(1,128)}', space=vmem, size = 0x9000, scoped, tag = 'internal scratch']
  %s0 = inlined_call_operand.vmem [shape: f32[2,579], index: 0, kind: input, shape index: {}]
  %s1 = inlined_call_operand.hbm [shape: f32[579,256], index: 1, kind: input, shape index: {}]
  %s2 = inlined_call_operand.vmem [shape: f32[1,256], index: 2, kind: input, shape index: {}]
  %s3 = inlined_call_operand.vmem [shape: f32[256,64], index: 3, kind: input, shape index: {}]
  %s4 = inlined_call_operand.vmem [shape: f32[1,64], index: 4, kind: input, shape index: {}]
  %s5 = inlined_call_operand.vmem [shape: f32[64,6], index: 5, kind: input, shape index: {}]
  %s6 = inlined_call_operand.vmem [shape: f32[1,6], index: 6, kind: input, shape index: {}]
  %s7 = inlined_call_operand.hbm [shape: f32[2,6], index: 7, kind: output, shape index: {}]
  %s8 = sld [smem:[#allocation0]]
  $region42: #{maverick_forward.1} parent=0
    _
  %s10 = ssub.s32 1, %s8
  %s11 = scalar_select 0, %s10, %s8
  $region1: #{maverick_forward.1} parent=0
    #allocation2 [shape = 'u8[598016]{0}', space=vmem, size = 0x92000, scoped, tag = 'input window, operand 1, single buffered']
    #allocation3 [shape = 's32[1]{0}', space=sflag, size = 0x4, scoped, tag = 'scoped memory for maverick_forward.1']
    #allocation4 [shape = 's32[1]{0}', space=sflag, size = 0x4, scoped, tag = 'scoped memory for maverick_forward.1']
    #allocation5 [shape = 'u8[1024]{0}', space=vmem, size = 0x400, scoped, tag = 'output window, operand 0, single buffered']
    %12 = vsyncpa [#allocation3], 0
    %13 = vsyncpa [#allocation4], 0
    // Predicated region
    $region2: #{maverick_forward.1} parent=1 // pred_check
      _
    $region3: #{maverick_forward.1} parent=1 // pred_check_branch
      %15 = sbr.rel (0) target = $region5
    $region4: #{maverick_forward.1} parent=1 // pred_region
      _
    $region5: #{maverick_forward.1} parent=1 // pred_fallthru
      _
    // Predicated region
    $region6: #{maverick_forward.1} parent=1 // pred_check
      _
    $region7: #{maverick_forward.1} parent=1 // pred_check_branch
      %17 = sbr.rel (0) target = $region9
    $region8: #{maverick_forward.1} parent=1 // pred_region
      %19 = vsyncadd [#allocation3], 0
      %s20 = sshll.u32 %s1, 4
      %s21 = int_to_ptr.hbm [resolvable:$true] %s20
      %s22 = sshll.u32 [#allocation2], 4
      %s23 = int_to_ptr.vmem [resolvable:$true] %s22
      %28 = dma.hbm_to_vmem [thread:$0]  %s21, 18688, %s23, [#allocation3], 256, 256, 16
    $region9: #{maverick_forward.1} parent=1 // pred_fallthru
      _
    // Predicated region
    $region10: #{maverick_forward.1} parent=1 // pred_check
      _
    $region11: #{maverick_forward.1} parent=1 // pred_check_branch
      %30 = sbr.rel (0) target = $region13
    $region12: #{maverick_forward.1} parent=1 // pred_region
      _
    $region13: #{maverick_forward.1} parent=1 // pred_fallthru
      _
    // Predicated region
    $region14: #{maverick_forward.1} parent=1 // pred_check
      _
    $region15: #{maverick_forward.1} parent=1 // pred_check_branch
      %32 = sbr.rel (0) target = $region17
    $region16: #{maverick_forward.1} parent=1 // pred_region
      _
    $region17: #{maverick_forward.1} parent=1 // pred_fallthru
      _
    // Predicated region
    $region18: #{maverick_forward.1} parent=1 // pred_check
      _
    $region19: #{maverick_forward.1} parent=1 // pred_check_branch
      %34 = sbr.rel (0) target = $region21
    $region20: #{maverick_forward.1} parent=1 // pred_region
      _
    $region21: #{maverick_forward.1} parent=1 // pred_fallthru
      _
    // Predicated region
    $region22: #{maverick_forward.1} parent=1 // pred_check
      _
    $region23: #{maverick_forward.1} parent=1 // pred_check_branch
      %36 = sbr.rel (0) target = $region25
    $region24: #{maverick_forward.1} parent=1 // pred_region
      _
    $region25: #{maverick_forward.1} parent=1 // pred_fallthru
      _
    // Predicated region
    $region26: #{maverick_forward.1} parent=1 // pred_check
      _
    $region27: #{maverick_forward.1} parent=1 // pred_check_branch
      %38 = sbr.rel (0) target = $region29
    $region28: #{maverick_forward.1} parent=1 // pred_region
      _
    $region29: #{maverick_forward.1} parent=1 // pred_fallthru
      _
    // Predicated region
    $region30: #{maverick_forward.1} parent=1 // pred_check
      _
    $region31: #{maverick_forward.1} parent=1 // pred_check_branch
      %40 = sbr.rel (0) target = $region33
    $region32: #{maverick_forward.1} parent=1 // pred_region
      %42 = dma.done [#allocation3], 18688
    $region33: #{maverick_forward.1} parent=1 // pred_fallthru
      _
    %v44 = vld [vmem:[%s0] sm:$0xff]
    %v45 = vld [vmem:[%s0 + $0x8] sm:$0x3]
    %48 = vst [vmem:[#allocation1] ss:$4 sm:$0xff] %v44
    %s49 = scalar_lea.vmem [#allocation1], 32
    %50 = vst [vmem:[%s49] ss:$4 sm:$0xff] %v45
    %v51 = vld.sshfl [vmem:[#allocation1] sm:$0xff pattern:$0x73625140]
    %v52 = vld.sshfl [vmem:[#allocation1 + $0x8] sm:$0xff pattern:$0x73625140]
    %v53 = vld.sshfl [vmem:[#allocation1 + $0x10] sm:$0xff pattern:$0x73625140]
    %v54 = vld.sshfl [vmem:[#allocation1 + $0x18] sm:$0xff pattern:$0x73625140]
    %v55 = vld.sshfl [vmem:[#allocation1 + $0x20] sm:$0xff pattern:$0x73625140]
    %v61 = vpack.c.bf16 %v51, %v51
    %v62 = vpack.c.bf16 %v52, %v52
    %v63 = vpack.c.bf16 %v53, %v53
    %v64 = vpack.c.bf16 %v54, %v54
    %v65 = vpack.c.bf16 %v55, %v55
    %v66 = vld [vmem:[#allocation2] sm:$0xff]
    %v67 = vld [vmem:[#allocation2 + $0x8] sm:$0xff]
    %v68 = vld [vmem:[#allocation2 + $0x10] sm:$0xff]
    %v69 = vld [vmem:[#allocation2 + $0x18] sm:$0xff]
    %v70 = vld [vmem:[#allocation2 + $0x20] sm:$0xff]
    %v71 = vld [vmem:[#allocation2 + $0x28] sm:$0xff]
    %v72 = vld [vmem:[#allocation2 + $0x30] sm:$0xff]
    %v73 = vld [vmem:[#allocation2 + $0x38] sm:$0xff]
    %v74 = vld [vmem:[#allocation2 + $0x40] sm:$0xff]
    %v75 = vld [vmem:[#allocation2 + $0x48] sm:$0xff]
    %v76 = vld [vmem:[#allocation2 + $0x50] sm:$0xff]
    %v77 = vld [vmem:[#allocation2 + $0x58] sm:$0xff]
    %v78 = vld [vmem:[#allocation2 + $0x60] sm:$0xff]
    %v79 = vld [vmem:[#allocation2 + $0x68] sm:$0xff]
    %v80 = vld [vmem:[#allocation2 + $0x70] sm:$0xff]
    %v81 = vld [vmem:[#allocation2 + $0x78] sm:$0xff]
    %v82 = vld [vmem:[#allocation2 + $0x80] sm:$0xff]
    %v83 = vld [vmem:[#allocation2 + $0x88] sm:$0xff]
    %v84 = vld [vmem:[#allocation2 + $0x90] sm:$0xff]
    %v85 = vld [vmem:[#allocation2 + $0x98] sm:$0xff]
    %v86 = vld [vmem:[#allocation2 + $0xa0] sm:$0xff]
    %v87 = vld [vmem:[#allocation2 + $0xa8] sm:$0xff]
    %v88 = vld [vmem:[#allocation2 + $0xb0] sm:$0xff]
    %v89 = vld [vmem:[#allocation2 + $0xb8] sm:$0xff]
    %v90 = vld [vmem:[#allocation2 + $0xc0] sm:$0xff]
    %v91 = vld [vmem:[#allocation2 + $0xc8] sm:$0xff]
    %v92 = vld [vmem:[#allocation2 + $0xd0] sm:$0xff]
    %v93 = vld [vmem:[#allocation2 + $0xd8] sm:$0xff]
    %v94 = vld [vmem:[#allocation2 + $0xe0] sm:$0xff]
    %v95 = vld [vmem:[#allocation2 + $0xe8] sm:$0xff]
    %v96 = vld [vmem:[#allocation2 + $0xf0] sm:$0xff]
    %v97 = vld [vmem:[#allocation2 + $0xf8] sm:$0xff]
    %v98 = vld [vmem:[#allocation2 + $0x100] sm:$0xff]
    %v99 = vld [vmem:[#allocation2 + $0x108] sm:$0xff]
    %v100 = vld [vmem:[#allocation2 + $0x110] sm:$0xff]
    %v101 = vld [vmem:[#allocation2 + $0x118] sm:$0xff]
    %v102 = vld [vmem:[#allocation2 + $0x120] sm:$0xff]
    %v103 = vld [vmem:[#allocation2 + $0x128] sm:$0xff]
    %v104 = vld [vmem:[#allocation2 + $0x130] sm:$0xff]
    %v105 = vld [vmem:[#allocation2 + $0x138] sm:$0xff]
    %v106 = vld [vmem:[#allocation2 + $0x140] sm:$0xff]
    %v107 = vld [vmem:[#allocation2 + $0x148] sm:$0xff]
    %v108 = vld [vmem:[#allocation2 + $0x150] sm:$0xff]
    %v109 = vld [vmem:[#allocation2 + $0x158] sm:$0xff]
    %v110 = vld [vmem:[#allocation2 + $0x160] sm:$0xff]
    %v111 = vld [vmem:[#allocation2 + $0x168] sm:$0xff]
    %v112 = vld [vmem:[#allocation2 + $0x170] sm:$0xff]
    %v113 = vld [vmem:[#allocation2 + $0x178] sm:$0xff]
    %v114 = vld [vmem:[#allocation2 + $0x180] sm:$0xff]
    %v115 = vld [vmem:[#allocation2 + $0x188] sm:$0xff]
    %v116 = vld [vmem:[#allocation2 + $0x190] sm:$0xff]
    %v117 = vld [vmem:[#allocation2 + $0x198] sm:$0xff]
    %v118 = vld [vmem:[#allocation2 + $0x1a0] sm:$0xff]
    %v119 = vld [vmem:[#allocation2 + $0x1a8] sm:$0xff]
    %v120 = vld [vmem:[#allocation2 + $0x1b0] sm:$0xff]
    %v121 = vld [vmem:[#allocation2 + $0x1b8] sm:$0xff]
    %v122 = vld [vmem:[#allocation2 + $0x1c0] sm:$0xff]
    %v123 = vld [vmem:[#allocation2 + $0x1c8] sm:$0xff]
    %v124 = vld [vmem:[#allocation2 + $0x1d0] sm:$0xff]
    %v125 = vld [vmem:[#allocation2 + $0x1d8] sm:$0xff]
    %v126 = vld [vmem:[#allocation2 + $0x1e0] sm:$0xff]
    %v127 = vld [vmem:[#allocation2 + $0x1e8] sm:$0xff]
    %v128 = vld [vmem:[#allocation2 + $0x1f0] sm:$0xff]
    %v129 = vld [vmem:[#allocation2 + $0x1f8] sm:$0xff]
    %v130 = vld [vmem:[#allocation2 + $0x200] sm:$0xff]
    %v131 = vld [vmem:[#allocation2 + $0x208] sm:$0xff]
    %v132 = vld [vmem:[#allocation2 + $0x210] sm:$0xff]
    %v133 = vld [vmem:[#allocation2 + $0x218] sm:$0xff]
    %v134 = vld [vmem:[#allocation2 + $0x220] sm:$0xff]
    %v135 = vld [vmem:[#allocation2 + $0x228] sm:$0xff]
    %v136 = vld [vmem:[#allocation2 + $0x230] sm:$0xff]
    %v137 = vld [vmem:[#allocation2 + $0x238] sm:$0xff]
    %v138 = vld [vmem:[#allocation2 + $0x240] sm:$0xff]
    %v139 = vld [vmem:[#allocation2 + $0x248] sm:$0xff]
    %v140 = vld [vmem:[#allocation2 + $0x250] sm:$0xff]
    %v141 = vld [vmem:[#allocation2 + $0x258] sm:$0xff]
    %v142 = vld [vmem:[#allocation2 + $0x260] sm:$0xff]
    %v143 = vld [vmem:[#allocation2 + $0x268] sm:$0xff]
    %v144 = vld [vmem:[#allocation2 + $0x270] sm:$0xff]
    %v145 = vld [vmem:[#allocation2 + $0x278] sm:$0xff]
    %v146 = vld [vmem:[#allocation2 + $0x280] sm:$0xff]
    %v147 = vld [vmem:[#allocation2 + $0x288] sm:$0xff]
    %v148 = vld [vmem:[#allocation2 + $0x290] sm:$0xff]
    %v149 = vld [vmem:[#allocation2 + $0x298] sm:$0xff]
    %v150 = vld [vmem:[#allocation2 + $0x2a0] sm:$0xff]
    %v151 = vld [vmem:[#allocation2 + $0x2a8] sm:$0xff]
    %v152 = vld [vmem:[#allocation2 + $0x2b0] sm:$0xff]
    %v153 = vld [vmem:[#allocation2 + $0x2b8] sm:$0xff]
    %v154 = vld [vmem:[#allocation2 + $0x2c0] sm:$0xff]
    %v155 = vld [vmem:[#allocation2 + $0x2c8] sm:$0xff]
    %v156 = vld [vmem:[#allocation2 + $0x2d0] sm:$0xff]
    %v157 = vld [vmem:[#allocation2 + $0x2d8] sm:$0xff]
    %v158 = vld [vmem:[#allocation2 + $0x2e0] sm:$0xff]
    %v159 = vld [vmem:[#allocation2 + $0x2e8] sm:$0xff]
    %v160 = vld [vmem:[#allocation2 + $0x2f0] sm:$0xff]
    %v161 = vld [vmem:[#allocation2 + $0x2f8] sm:$0xff]
    %v162 = vld [vmem:[#allocation2 + $0x300] sm:$0xff]
    %v163 = vld [vmem:[#allocation2 + $0x308] sm:$0xff]
    %v164 = vld [vmem:[#allocation2 + $0x310] sm:$0xff]
    %v165 = vld [vmem:[#allocation2 + $0x318] sm:$0xff]
    %v166 = vld [vmem:[#allocation2 + $0x320] sm:$0xff]
    %v167 = vld [vmem:[#allocation2 + $0x328] sm:$0xff]
    %v168 = vld [vmem:[#allocation2 + $0x330] sm:$0xff]
    %v169 = vld [vmem:[#allocation2 + $0x338] sm:$0xff]
    %v170 = vld [vmem:[#allocation2 + $0x340] sm:$0xff]
    %v171 = vld [vmem:[#allocation2 + $0x348] sm:$0xff]
    %v172 = vld [vmem:[#allocation2 + $0x350] sm:$0xff]
    %v173 = vld [vmem:[#allocation2 + $0x358] sm:$0xff]
    %v174 = vld [vmem:[#allocation2 + $0x360] sm:$0xff]
    %v175 = vld [vmem:[#allocation2 + $0x368] sm:$0xff]
    %v176 = vld [vmem:[#allocation2 + $0x370] sm:$0xff]
    %v177 = vld [vmem:[#allocation2 + $0x378] sm:$0xff]
    %v178 = vld [vmem:[#allocation2 + $0x380] sm:$0xff]
    %v179 = vld [vmem:[#allocation2 + $0x388] sm:$0xff]
    %v180 = vld [vmem:[#allocation2 + $0x390] sm:$0xff]
    %v181 = vld [vmem:[#allocation2 + $0x398] sm:$0xff]
    %v182 = vld [vmem:[#allocation2 + $0x3a0] sm:$0xff]
    %v183 = vld [vmem:[#allocation2 + $0x3a8] sm:$0xff]
    %v184 = vld [vmem:[#allocation2 + $0x3b0] sm:$0xff]
    %v185 = vld [vmem:[#allocation2 + $0x3b8] sm:$0xff]
    %v186 = vld [vmem:[#allocation2 + $0x3c0] sm:$0xff]
    %v187 = vld [vmem:[#allocation2 + $0x3c8] sm:$0xff]
    %v188 = vld [vmem:[#allocation2 + $0x3d0] sm:$0xff]
    %v189 = vld [vmem:[#allocation2 + $0x3d8] sm:$0xff]
    %v190 = vld [vmem:[#allocation2 + $0x3e0] sm:$0xff]
    %v191 = vld [vmem:[#allocation2 + $0x3e8] sm:$0xff]
    %v192 = vld [vmem:[#allocation2 + $0x3f0] sm:$0xff]
    %v193 = vld [vmem:[#allocation2 + $0x3f8] sm:$0xff]
    %v194 = vld [vmem:[#allocation2 + $0x400] sm:$0xff]
    %v195 = vld [vmem:[#allocation2 + $0x408] sm:$0xff]
    %v196 = vld [vmem:[#allocation2 + $0x410] sm:$0xff]
    %v197 = vld [vmem:[#allocation2 + $0x418] sm:$0xff]
    %v198 = vld [vmem:[#allocation2 + $0x420] sm:$0xff]
    %v199 = vld [vmem:[#allocation2 + $0x428] sm:$0xff]
    %v200 = vld [vmem:[#allocation2 + $0x430] sm:$0xff]
    %v201 = vld [vmem:[#allocation2 + $0x438] sm:$0xff]
    %v202 = vld [vmem:[#allocation2 + $0x440] sm:$0xff]
    %v203 = vld [vmem:[#allocation2 + $0x448] sm:$0xff]
    %v204 = vld [vmem:[#allocation2 + $0x450] sm:$0xff]
    %v205 = vld [vmem:[#allocation2 + $0x458] sm:$0xff]
    %v206 = vld [vmem:[#allocation2 + $0x460] sm:$0xff]
    %v207 = vld [vmem:[#allocation2 + $0x468] sm:$0xff]
    %v208 = vld [vmem:[#allocation2 + $0x470] sm:$0xff]
    %v209 = vld [vmem:[#allocation2 + $0x478] sm:$0xff]
    %v210 = vld [vmem:[#allocation2 + $0x480] sm:$0x7]
    %v211 = vld [vmem:[#allocation2 + $0x488] sm:$0x7]
    %v212 = vpack.c.bf16 %v68, %v66
    %v213 = vpack.c.bf16 %v69, %v67
    %v214 = vpack.c.bf16 %v72, %v70
    %v215 = vpack.c.bf16 %v73, %v71
    %v216 = vpack.c.bf16 %v76, %v74
    %v217 = vpack.c.bf16 %v77, %v75
    %v218 = vpack.c.bf16 %v80, %v78
    %v219 = vpack.c.bf16 %v81, %v79
    %v220 = vpack.c.bf16 %v84, %v82
    %v221 = vpack.c.bf16 %v85, %v83
    %v222 = vpack.c.bf16 %v88, %v86
    %v223 = vpack.c.bf16 %v89, %v87
    %v224 = vpack.c.bf16 %v92, %v90
    %v225 = vpack.c.bf16 %v93, %v91
    %v226 = vpack.c.bf16 %v96, %v94
    %v227 = vpack.c.bf16 %v97, %v95
    %v228 = vpack.c.bf16 %v100, %v98
    %v229 = vpack.c.bf16 %v101, %v99
    %v230 = vpack.c.bf16 %v104, %v102
    %v231 = vpack.c.bf16 %v105, %v103
    %v232 = vpack.c.bf16 %v108, %v106
    %v233 = vpack.c.bf16 %v109, %v107
    %v234 = vpack.c.bf16 %v112, %v110
    %v235 = vpack.c.bf16 %v113, %v111
    %v236 = vpack.c.bf16 %v116, %v114
    %v237 = vpack.c.bf16 %v117, %v115
    %v238 = vpack.c.bf16 %v120, %v118
    %v239 = vpack.c.bf16 %v121, %v119
    %v240 = vpack.c.bf16 %v124, %v122
    %v241 = vpack.c.bf16 %v125, %v123
    %v242 = vpack.c.bf16 %v128, %v126
    %v243 = vpack.c.bf16 %v129, %v127
    %v244 = vpack.c.bf16 %v132, %v130
    %v245 = vpack.c.bf16 %v133, %v131
    %v246 = vpack.c.bf16 %v136, %v134
    %v247 = vpack.c.bf16 %v137, %v135
    %v248 = vpack.c.bf16 %v140, %v138
    %v249 = vpack.c.bf16 %v141, %v139
    %v250 = vpack.c.bf16 %v144, %v142
    %v251 = vpack.c.bf16 %v145, %v143
    %v252 = vpack.c.bf16 %v148, %v146
    %v253 = vpack.c.bf16 %v149, %v147
    %v254 = vpack.c.bf16 %v152, %v150
    %v255 = vpack.c.bf16 %v153, %v151
    %v256 = vpack.c.bf16 %v156, %v154
    %v257 = vpack.c.bf16 %v157, %v155
    %v258 = vpack.c.bf16 %v160, %v158
    %v259 = vpack.c.bf16 %v161, %v159
    %v260 = vpack.c.bf16 %v164, %v162
    %v261 = vpack.c.bf16 %v165, %v163
    %v262 = vpack.c.bf16 %v168, %v166
    %v263 = vpack.c.bf16 %v169, %v167
    %v264 = vpack.c.bf16 %v172, %v170
    %v265 = vpack.c.bf16 %v173, %v171
    %v266 = vpack.c.bf16 %v176, %v174
    %v267 = vpack.c.bf16 %v177, %v175
    %v268 = vpack.c.bf16 %v180, %v178
    %v269 = vpack.c.bf16 %v181, %v179
    %v270 = vpack.c.bf16 %v184, %v182
    %v271 = vpack.c.bf16 %v185, %v183
    %v272 = vpack.c.bf16 %v188, %v186
    %v273 = vpack.c.bf16 %v189, %v187
    %v274 = vpack.c.bf16 %v192, %v190
    %v275 = vpack.c.bf16 %v193, %v191
    %v276 = vpack.c.bf16 %v196, %v194
    %v277 = vpack.c.bf16 %v197, %v195
    %v278 = vpack.c.bf16 %v200, %v198
    %v279 = vpack.c.bf16 %v201, %v199
    %v280 = vpack.c.bf16 %v204, %v202
    %v281 = vpack.c.bf16 %v205, %v203
    %v282 = vpack.c.bf16 %v208, %v206
    %v283 = vpack.c.bf16 %v209, %v207
    %v284 = vpack.c.bf16 %v210, %v210
    %v285 = vpack.c.bf16 %v211, %v211
    %v286 = vld [vmem:[%s2] sm:$0x3]
    %v288 = vperm.slane %v286, 0
    %v289 = vperm.slane %v286, 1
    %vm292 = vcmask 547840
    %v294 = vsel %vm292, %v65, 0
    %vm296 = vcmask 1040384
    %vm297 = vcmask 1041408
    %v298 = vsel %vm296, 4294967295, 65535
    %v299 = vsel %vm297, %v298, 0
    %v301 = vand.u32 %v284, %v299
    %v304 = vand.u32 %v285, %v299
    %306 = vmatpush.bf16.msra.mxu0 %v226
    %307 = vmatpush.bf16.msra.mxu0 %v224
    %308 = vmatpush.bf16.msra.mxu0 %v222
    %309 = vmatpush.bf16.msra.mxu0 %v220
    %310 = vmatpush.bf16.msra.mxu0 %v218
    %311 = vmatpush.bf16.msra.mxu0 %v216
    %312 = vmatpush.bf16.msra.mxu0 %v214
    %313 = vmatpush.bf16.msra.mxu0 %v212
    %314 = vmatmul.bf16.gmra.mxu0 %v61
    %v315 = vpop.f32.mrf.mxu0
    %v316 = vadd.f32 %v288, %v315
    %v317 = vpop.f32.mrf.mxu0
    %318 = vdwg.mxu0
    %319 = vmatpush.bf16.msra.mxu0 %v242
    %320 = vmatpush.bf16.msra.mxu0 %v240
    %321 = vmatpush.bf16.msra.mxu0 %v238
    %322 = vmatpush.bf16.msra.mxu0 %v236
    %323 = vmatpush.bf16.msra.mxu0 %v234
    %324 = vmatpush.bf16.msra.mxu0 %v232
    %325 = vmatpush.bf16.msra.mxu0 %v230
    %326 = vmatpush.bf16.msra.mxu0 %v228
    %327 = vmatmul.bf16.gmra.mxu0 %v62
    %v328 = vpop.f32.mrf.mxu0
    %v329 = vadd.f32 %v316, %v328
    %v330 = vpop.f32.mrf.mxu0
    %331 = vdwg.mxu0
    %332 = vmatpush.bf16.msra.mxu0 %v258
    %333 = vmatpush.bf16.msra.mxu0 %v256
    %334 = vmatpush.bf16.msra.mxu0 %v254
    %335 = vmatpush.bf16.msra.mxu0 %v252
    %336 = vmatpush.bf16.msra.mxu0 %v250
    %337 = vmatpush.bf16.msra.mxu0 %v248
    %338 = vmatpush.bf16.msra.mxu0 %v246
    %339 = vmatpush.bf16.msra.mxu0 %v244
    %340 = vmatmul.bf16.gmra.mxu0 %v63
    %v341 = vpop.f32.mrf.mxu0
    %v342 = vadd.f32 %v329, %v341
    %v343 = vpop.f32.mrf.mxu0
    %344 = vdwg.mxu0
    %345 = vmatpush.bf16.msra.mxu0 %v274
    %346 = vmatpush.bf16.msra.mxu0 %v272
    %347 = vmatpush.bf16.msra.mxu0 %v270
    %348 = vmatpush.bf16.msra.mxu0 %v268
    %349 = vmatpush.bf16.msra.mxu0 %v266
    %350 = vmatpush.bf16.msra.mxu0 %v264
    %351 = vmatpush.bf16.msra.mxu0 %v262
    %352 = vmatpush.bf16.msra.mxu0 %v260
    %353 = vmatmul.bf16.gmra.mxu0 %v64
    %v354 = vpop.f32.mrf.mxu0
    %v355 = vadd.f32 %v342, %v354
    %v356 = vpop.f32.mrf.mxu0
    %357 = vdwg.mxu0
    %358 = vmatpush.bf16.msra.mxu0 0
    %359 = vmatpush.bf16.msra.mxu0 0
    %360 = vmatpush.bf16.msra.mxu0 0
    %361 = vmatpush.bf16.msra.mxu0 %v301
    %362 = vmatpush.bf16.msra.mxu0 %v282
    %363 = vmatpush.bf16.msra.mxu0 %v280
    %364 = vmatpush.bf16.msra.mxu0 %v278
    %365 = vmatpush.bf16.msra.mxu0 %v276
    %366 = vmatmul.bf16.gmra.mxu0 %v294
    %v367 = vpop.f32.mrf.mxu0
    %v368 = vadd.f32 %v355, %v367
    %v369 = vpop.f32.mrf.mxu0
    %370 = vdwg.mxu0
    %371 = vmatpush.bf16.msra.mxu0 %v227
    %372 = vmatpush.bf16.msra.mxu0 %v225
    %373 = vmatpush.bf16.msra.mxu0 %v223
    %374 = vmatpush.bf16.msra.mxu0 %v221
    %375 = vmatpush.bf16.msra.mxu0 %v219
    %376 = vmatpush.bf16.msra.mxu0 %v217
    %377 = vmatpush.bf16.msra.mxu0 %v215
    %378 = vmatpush.bf16.msra.mxu0 %v213
    %379 = vmatmul.bf16.gmra.mxu0 %v61
    %v380 = vpop.f32.mrf.mxu0
    %v381 = vadd.f32 %v289, %v380
    %v382 = vpop.f32.mrf.mxu0
    %383 = vdwg.mxu0
    %384 = vmatpush.bf16.msra.mxu0 %v243
    %385 = vmatpush.bf16.msra.mxu0 %v241
    %386 = vmatpush.bf16.msra.mxu0 %v239
    %387 = vmatpush.bf16.msra.mxu0 %v237
    %388 = vmatpush.bf16.msra.mxu0 %v235
    %389 = vmatpush.bf16.msra.mxu0 %v233
    %390 = vmatpush.bf16.msra.mxu0 %v231
    %391 = vmatpush.bf16.msra.mxu0 %v229
    %392 = vmatmul.bf16.gmra.mxu0 %v62
    %v393 = vpop.f32.mrf.mxu0
    %v394 = vadd.f32 %v381, %v393
    %v395 = vpop.f32.mrf.mxu0
    %396 = vdwg.mxu0
    %397 = vmatpush.bf16.msra.mxu0 %v259
    %398 = vmatpush.bf16.msra.mxu0 %v257
    %399 = vmatpush.bf16.msra.mxu0 %v255
    %400 = vmatpush.bf16.msra.mxu0 %v253
    %401 = vmatpush.bf16.msra.mxu0 %v251
    %402 = vmatpush.bf16.msra.mxu0 %v249
    %403 = vmatpush.bf16.msra.mxu0 %v247
    %404 = vmatpush.bf16.msra.mxu0 %v245
    %405 = vmatmul.bf16.gmra.mxu0 %v63
    %v406 = vpop.f32.mrf.mxu0
    %v407 = vadd.f32 %v394, %v406
    %v408 = vpop.f32.mrf.mxu0
    %409 = vdwg.mxu0
    %410 = vmatpush.bf16.msra.mxu0 %v275
    %411 = vmatpush.bf16.msra.mxu0 %v273
    %412 = vmatpush.bf16.msra.mxu0 %v271
    %413 = vmatpush.bf16.msra.mxu0 %v269
    %414 = vmatpush.bf16.msra.mxu0 %v267
    %415 = vmatpush.bf16.msra.mxu0 %v265
    %416 = vmatpush.bf16.msra.mxu0 %v263
    %417 = vmatpush.bf16.msra.mxu0 %v261
    %418 = vmatmul.bf16.gmra.mxu0 %v64
    %v419 = vpop.f32.mrf.mxu0
    %v420 = vadd.f32 %v407, %v419
    %v421 = vpop.f32.mrf.mxu0
    %422 = vdwg.mxu0
    %423 = vmatpush.bf16.msra.mxu0 0
    %424 = vmatpush.bf16.msra.mxu0 0
    %425 = vmatpush.bf16.msra.mxu0 0
    %426 = vmatpush.bf16.msra.mxu0 %v304
    %427 = vmatpush.bf16.msra.mxu0 %v283
    %428 = vmatpush.bf16.msra.mxu0 %v281
    %429 = vmatpush.bf16.msra.mxu0 %v279
    %430 = vmatpush.bf16.msra.mxu0 %v277
    %431 = vmatmul.bf16.gmra.mxu0 %v294
    %v432 = vpop.f32.mrf.mxu0
    %v433 = vadd.f32 %v420, %v432
    %v434 = vpop.f32.mrf.mxu0
    %435 = vdwg.mxu0
    %v436 = vmax.f32 %v368, 0.0
    %v437 = vmax.f32 %v433, 0.0
    %v438 = vpack.c.bf16 %v436, %v436
    %v439 = vpack.c.bf16 %v437, %v437
    %v440 = vld [vmem:[%s3] sm:$0xff]
    %v441 = vld [vmem:[%s3 + $0x8] sm:$0xff]
    %v442 = vld [vmem:[%s3 + $0x10] sm:$0xff]
    %v443 = vld [vmem:[%s3 + $0x18] sm:$0xff]
    %v444 = vld [vmem:[%s3 + $0x20] sm:$0xff]
    %v445 = vld [vmem:[%s3 + $0x28] sm:$0xff]
    %v446 = vld [vmem:[%s3 + $0x30] sm:$0xff]
    %v447 = vld [vmem:[%s3 + $0x38] sm:$0xff]
    %v448 = vld [vmem:[%s3 + $0x40] sm:$0xff]
    %v449 = vld [vmem:[%s3 + $0x48] sm:$0xff]
    %v450 = vld [vmem:[%s3 + $0x50] sm:$0xff]
    %v451 = vld [vmem:[%s3 + $0x58] sm:$0xff]
    %v452 = vld [vmem:[%s3 + $0x60] sm:$0xff]
    %v453 = vld [vmem:[%s3 + $0x68] sm:$0xff]
    %v454 = vld [vmem:[%s3 + $0x70] sm:$0xff]
    %v455 = vld [vmem:[%s3 + $0x78] sm:$0xff]
    %v456 = vld [vmem:[%s3 + $0x80] sm:$0xff]
    %v457 = vld [vmem:[%s3 + $0x88] sm:$0xff]
    %v458 = vld [vmem:[%s3 + $0x90] sm:$0xff]
    %v459 = vld [vmem:[%s3 + $0x98] sm:$0xff]
    %v460 = vld [vmem:[%s3 + $0xa0] sm:$0xff]
    %v461 = vld [vmem:[%s3 + $0xa8] sm:$0xff]
    %v462 = vld [vmem:[%s3 + $0xb0] sm:$0xff]
    %v463 = vld [vmem:[%s3 + $0xb8] sm:$0xff]
    %v464 = vld [vmem:[%s3 + $0xc0] sm:$0xff]
    %v465 = vld [vmem:[%s3 + $0xc8] sm:$0xff]
    %v466 = vld [vmem:[%s3 + $0xd0] sm:$0xff]
    %v467 = vld [vmem:[%s3 + $0xd8] sm:$0xff]
    %v468 = vld [vmem:[%s3 + $0xe0] sm:$0xff]
    %v469 = vld [vmem:[%s3 + $0xe8] sm:$0xff]
    %v470 = vld [vmem:[%s3 + $0xf0] sm:$0xff]
    %v471 = vld [vmem:[%s3 + $0xf8] sm:$0xff]
    %v472 = vpack.c.bf16 %v441, %v440
    %v473 = vpack.c.bf16 %v443, %v442
    %v474 = vpack.c.bf16 %v445, %v444
    %v475 = vpack.c.bf16 %v447, %v446
    %v476 = vpack.c.bf16 %v449, %v448
    %v477 = vpack.c.bf16 %v451, %v450
    %v478 = vpack.c.bf16 %v453, %v452
    %v479 = vpack.c.bf16 %v455, %v454
    %v480 = vpack.c.bf16 %v457, %v456
    %v481 = vpack.c.bf16 %v459, %v458
    %v482 = vpack.c.bf16 %v461, %v460
    %v483 = vpack.c.bf16 %v463, %v462
    %v484 = vpack.c.bf16 %v465, %v464
    %v485 = vpack.c.bf16 %v467, %v466
    %v486 = vpack.c.bf16 %v469, %v468
    %v487 = vpack.c.bf16 %v471, %v470
    %v488 = vld [vmem:[%s4] sm:$0x1]
    %v490 = vperm.slane %v488, 0
    %492 = vmatpush.bf16.msra.mxu0 %v479
    %493 = vmatpush.bf16.msra.mxu0 %v478
    %494 = vmatpush.bf16.msra.mxu0 %v477
    %495 = vmatpush.bf16.msra.mxu0 %v476
    %496 = vmatpush.bf16.msra.mxu0 %v475
    %497 = vmatpush.bf16.msra.mxu0 %v474
    %498 = vmatpush.bf16.msra.mxu0 %v473
    %499 = vmatpush.bf16.msra.mxu0 %v472
    %500 = vmatmul.bf16.gmra.mxu0 %v438
    %v501 = vpop.f32.mrf.mxu0
    %v502 = vadd.f32 %v490, %v501
    %v503 = vpop.f32.mrf.mxu0
    %504 = vdwg.mxu0
    %505 = vmatpush.bf16.msra.mxu0 %v487
    %506 = vmatpush.bf16.msra.mxu0 %v486
    %507 = vmatpush.bf16.msra.mxu0 %v485
    %508 = vmatpush.bf16.msra.mxu0 %v484
    %509 = vmatpush.bf16.msra.mxu0 %v483
    %510 = vmatpush.bf16.msra.mxu0 %v482
    %511 = vmatpush.bf16.msra.mxu0 %v481
    %512 = vmatpush.bf16.msra.mxu0 %v480
    %513 = vmatmul.bf16.gmra.mxu0 %v439
    %v514 = vpop.f32.mrf.mxu0
    %v515 = vadd.f32 %v502, %v514
    %v516 = vpop.f32.mrf.mxu0
    %517 = vdwg.mxu0
    %v518 = vmax.f32 %v515, 0.0
    %v519 = vpack.c.bf16 %v518, %v518
    %v520 = vld [vmem:[%s5] sm:$0xff]
    %v521 = vld [vmem:[%s5 + $0x8] sm:$0xff]
    %v522 = vld [vmem:[%s5 + $0x10] sm:$0xff]
    %v523 = vld [vmem:[%s5 + $0x18] sm:$0xff]
    %v524 = vld [vmem:[%s5 + $0x20] sm:$0xff]
    %v525 = vld [vmem:[%s5 + $0x28] sm:$0xff]
    %v526 = vld [vmem:[%s5 + $0x30] sm:$0xff]
    %v527 = vld [vmem:[%s5 + $0x38] sm:$0xff]
    %v528 = vpack.c.bf16 %v521, %v520
    %v529 = vpack.c.bf16 %v523, %v522
    %v530 = vpack.c.bf16 %v525, %v524
    %v531 = vpack.c.bf16 %v527, %v526
    %v532 = vld [vmem:[%s6] sm:$0x1]
    %v534 = vperm.slane %v532, 0
    %vm536 = vcmask 523264
    %v538 = vsel %vm536, %v519, 0
    %540 = vmatpush.bf16.msra.mxu0 0
    %541 = vmatpush.bf16.msra.mxu0 0
    %542 = vmatpush.bf16.msra.mxu0 0
    %543 = vmatpush.bf16.msra.mxu0 0
    %544 = vmatpush.bf16.msra.mxu0 %v531
    %545 = vmatpush.bf16.msra.mxu0 %v530
    %546 = vmatpush.bf16.msra.mxu0 %v529
    %547 = vmatpush.bf16.msra.mxu0 %v528
    %548 = vmatmul.bf16.gmra.mxu0 %v538
    %v549 = vpop.f32.mrf.mxu0
    %v550 = vadd.f32 %v534, %v549
    %v551 = vpop.f32.mrf.mxu0
    %552 = vdwg.mxu0
    %vm553 = vcmask 41984
    %554 = vst.msk [vmem:[#allocation5] sm:$0x3] %vm553, %v550
    // Predicated region
    $region34: #{maverick_forward.1} parent=1 // pred_check
      _
    $region35: #{maverick_forward.1} parent=1 // pred_check_branch
      %556 = sbr.rel (0) target = $region37
    $region36: #{maverick_forward.1} parent=1 // pred_region
      %558 = vsyncadd [#allocation4], 0
      %s560 = sshll.u32 [#allocation5], 4
      %s561 = int_to_ptr.vmem [resolvable:$true] %s560
      %s562 = sshll.u32 %s7, 4
      %s563 = int_to_ptr.hbm [resolvable:$true] %s562
      %565 = dma.vmem_to_hbm [thread:$0]  %s561, 32, %s563, [#allocation4]
    $region37: #{maverick_forward.1} parent=1 // pred_fallthru
      _
    // Predicated region
    $region38: #{maverick_forward.1} parent=1 // pred_check
      _
    $region39: #{maverick_forward.1} parent=1 // pred_check_branch
      %567 = sbr.rel (0) target = $region41
    $region40: #{maverick_forward.1} parent=1 // pred_region
      %569 = dma.done [#allocation4], 32
    $region41: #{maverick_forward.1} parent=1 // pred_fallthru
      _
    %570 = vsyncpa [#allocation3], 1
    %571 = vsyncpa [#allocation4], 1

</llo_original>
